<compile_context>
chip_gen: v7x
topology: tpu7x:2x2x1
jax: 0.10.0
libtpu: 0.0.40
codegen_flags: <defaults>
</compile_context>

<pallas_src>
import jax
import jax.numpy as jnp
from jax.experimental import pallas as pl
from jax.experimental.pallas import tpu as pltpu

LRELU_SLOPE = 0.2
LN_EPS = 1e-5


def _round_up(x, m):
    return (x + m - 1) // m * m


def _lrelu(x):
    return jnp.where(x >= 0, x, LRELU_SLOPE * x)


def _layer_norm(x, gamma, beta):
    # Two-pass statistics (centre first, then E[(x-mu)^2]) - mirrors PyTorch
    # LayerNorm and avoids catastrophic cancellation at large activation means.
    mu = jnp.mean(x, axis=-1, keepdims=True)
    xc = x - mu
    var = jnp.mean(xc * xc, axis=-1, keepdims=True)
    return xc * jax.lax.rsqrt(var + LN_EPS) * gamma + beta


# --------------------------------------------------------------------------
# Kernels
# --------------------------------------------------------------------------

def obs_prepass_kernel(obs_ref, w_obs_ref, p_obs_ref, fs_ref):
    """fs = LN_state(LeakyReLU(obs @ W_obs + b_obs)) for a tile of batch rows.

    p_obs rows: [b_obs, g_state, bt_state]."""
    obs_h = _lrelu(
        jnp.dot(obs_ref[...], w_obs_ref[...], preferred_element_type=jnp.float32)
        + p_obs_ref[0:1, :]
    )
    fs_ref[...] = _layer_norm(obs_h, p_obs_ref[1:2, :], p_obs_ref[2:3, :])


def qnet_rows_kernel(act_ref, fs_ref, w_act_ref, w_hid_ref, p_h_ref, p_h2_ref,
                     q_ref):
    """Per flattened (batch*action) row tile.

    act_ref: (TILE_M, E) bf16 pooled action embeddings.
    fs_ref:  (TILE_M, H) f32 precomputed LN_state(obs path), row-aligned.
    p_h rows:  [b_act, g_action, bt_action]        (3, H)
    p_h2 rows: [b_hid, g_hidden, bt_hidden, w_sc, b_sc(broadcast)]  (5, H2)
    q_ref: (1, TILE_M) lane-dense q output."""
    act_h = _lrelu(
        jnp.dot(act_ref[...], w_act_ref[...], preferred_element_type=jnp.float32)
        + p_h_ref[0:1, :]
    )
    final_state = fs_ref[...] * _layer_norm(act_h, p_h_ref[1:2, :], p_h_ref[2:3, :])

    hid = _layer_norm(
        _lrelu(
            jnp.dot(final_state.astype(jnp.bfloat16), w_hid_ref[...],
                    preferred_element_type=jnp.float32)
            + p_h2_ref[0:1, :]
        ),
        p_h2_ref[1:2, :], p_h2_ref[2:3, :],
    )

    # Score head: width-1 matmul replaced by VPU multiply + cross-lane reduce,
    # written lane-dense as a (1, TILE_M) row so the writeback is an unmasked vst.
    q = jnp.sum(hid * p_h2_ref[3:4, :], axis=-1)        # (TILE_M,)
    q_ref[...] = q[None, :] + p_h2_ref[4:5, 0:1]        # + b_sc


# --------------------------------------------------------------------------
# Wrapper
# --------------------------------------------------------------------------

def qnet_forward(obs_emb, act_emb, params):
    """obs_emb: (B, E) pooled observation embeddings.
    act_emb: (B, A, E) pooled action embeddings (A candidate actions per item).
    Returns q-values of shape (B, A)."""
    B, E = obs_emb.shape
    _, A, _ = act_emb.shape
    H = params["w_obs"].shape[1]
    H2 = params["w_hid"].shape[1]

    w_obs = params["w_obs"].astype(jnp.bfloat16)
    w_act = params["w_act"].astype(jnp.bfloat16)
    w_hid = params["w_hid"].astype(jnp.bfloat16)

    # Pack small per-feature params into stacked resident arrays.
    p_obs = jnp.concatenate(
        [params["b_obs"], params["g_s"], params["bt_s"]], axis=0
    ).astype(jnp.float32)                                            # (3, H)
    p_h = jnp.concatenate(
        [params["b_act"], params["g_a"], params["bt_a"]], axis=0
    ).astype(jnp.float32)                                            # (3, H)
    p_h2 = jnp.concatenate(
        [params["b_hid"], params["g_h"], params["bt_h"],
         params["w_sc"].reshape(1, H2).astype(jnp.float32),
         jnp.full((1, H2), params["b_sc"].reshape(()), jnp.float32)],
        axis=0,
    ).astype(jnp.float32)                                            # (5, H2)

    # ---- Observation pre-pass: all B items at once (batched MXU rows). ----
    tile_b = min(_round_up(B, 16), 256)
    b_pad = _round_up(B, tile_b)
    obs_bf = jnp.pad(obs_emb.astype(jnp.bfloat16), ((0, b_pad - B), (0, 0)))

    fs_obs = pl.pallas_call(
        obs_prepass_kernel,
        out_shape=jax.ShapeDtypeStruct((b_pad, H), jnp.float32),
        grid_spec=pltpu.PrefetchScalarGridSpec(
            num_scalar_prefetch=0,
            grid=(b_pad // tile_b,),
            in_specs=[
                pl.BlockSpec((tile_b, E), lambda i: (i, 0)),
                pl.BlockSpec((E, H), lambda i: (0, 0)),      # resident
                pl.BlockSpec((3, H), lambda i: (0, 0)),      # resident
            ],
            out_specs=pl.BlockSpec((tile_b, H), lambda i: (i, 0)),
        ),
        compiler_params=pltpu.CompilerParams(
            dimension_semantics=("parallel",),
        ),
    )(obs_bf, w_obs, p_obs)[:B]                                      # (B, H)

    # ---- Main kernel: flatten (B, A) into a single M = B*A row axis. ----
    M = B * A
    # Row tile: multiple of 16 (bf16 sublane packing), up to 256 (v6e/v7x MXU).
    tile_m = min(_round_up(M, 16), 256)
    m_pad = _round_up(M, tile_m)
    num_tiles = m_pad // tile_m

    act_flat = jnp.pad(act_emb.astype(jnp.bfloat16).reshape(M, E),
                       ((0, m_pad - M), (0, 0)))
    # Row-aligned observation features (tiny: M x H f32), zero-padded rows stay
    # finite through the kernel and are sliced off below.
    fs_rows = jnp.pad(
        jnp.broadcast_to(fs_obs[:, None, :], (B, A, H)).reshape(M, H),
        ((0, m_pad - M), (0, 0)))

    # VMEM budget: resident weights/params (default double-buffered) +
    # double-buffered streaming activation blocks + working set, 2x headroom,
    # capped at 32 MiB (safe for v7x's 64 MiB physical VMEM as well).
    resident_bytes = 2 * ((E * H + H * H2) * 2 + (6 * H + 5 * H2) * 4)
    stream_bytes = 2 * (tile_m * E * 2 + tile_m * H * 4 + tile_m * 4)
    work_bytes = 6 * tile_m * max(H, H2) * 4
    vmem_limit = int(min(2 * (resident_bytes + stream_bytes + work_bytes)
                         + (4 << 20), 32 << 20))

    q_pad = pl.pallas_call(
        qnet_rows_kernel,
        out_shape=jax.ShapeDtypeStruct((num_tiles, tile_m), jnp.float32),
        grid_spec=pltpu.PrefetchScalarGridSpec(
            num_scalar_prefetch=0,
            grid=(num_tiles,),
            in_specs=[
                pl.BlockSpec((tile_m, E), lambda i: (i, 0)),   # action tile
                pl.BlockSpec((tile_m, H), lambda i: (i, 0)),   # obs features tile
                pl.BlockSpec((E, H), lambda i: (0, 0)),        # resident weights
                pl.BlockSpec((H, H2), lambda i: (0, 0)),       # resident weights
                pl.BlockSpec((3, H), lambda i: (0, 0)),        # resident params
                pl.BlockSpec((5, H2), lambda i: (0, 0)),       # resident params
            ],
            out_specs=pl.BlockSpec((1, tile_m), lambda i: (i, 0)),  # lane-dense q
        ),
        compiler_params=pltpu.CompilerParams(
            dimension_semantics=("parallel",),   # fully parallel flattened grid
            vmem_limit_bytes=vmem_limit,
        ),
    )(act_flat, fs_rows, w_act, w_hid, p_h, p_h2)

    return q_pad.reshape(m_pad)[:M].reshape(B, A)


# --------------------------------------------------------------------------
# Pure-JAX reference (mirrors the kernel numerics: bf16 matmuls, f32 LN).
# --------------------------------------------------------------------------

def qnet_reference(obs_emb, act_emb, params):
    B, E = obs_emb.shape
    _, A, _ = act_emb.shape
    H2 = params["w_hid"].shape[1]

    obs_h = _lrelu(
        jnp.dot(obs_emb.astype(jnp.bfloat16), params["w_obs"].astype(jnp.bfloat16),
                preferred_element_type=jnp.float32) + params["b_obs"])
    fs_obs = _layer_norm(obs_h, params["g_s"], params["bt_s"])            # (B, H)

    act = act_emb.astype(jnp.bfloat16).reshape(B * A, E)
    act_h = _lrelu(
        jnp.dot(act, params["w_act"].astype(jnp.bfloat16),
                preferred_element_type=jnp.float32) + params["b_act"])
    fs_act = _layer_norm(act_h, params["g_a"], params["bt_a"]).reshape(B, A, -1)

    final = fs_obs[:, None, :] * fs_act                                    # (B, A, H)
    hid = _layer_norm(
        _lrelu(
            jnp.dot(final.astype(jnp.bfloat16), params["w_hid"].astype(jnp.bfloat16),
                    preferred_element_type=jnp.float32) + params["b_hid"]),
        params["g_h"], params["bt_h"])
    q = jnp.sum(hid * params["w_sc"].reshape(1, 1, H2), axis=-1)
    return q + params["b_sc"].reshape(())                                  # (B, A)


def make_params(key, embedding_size, hidden_size):
    H2 = hidden_size // 2
    ks = jax.random.split(key, 8)
    scale = 0.1
    return {
        # nn.Linear weights stored transposed as (in, out).
        "w_obs": scale * jax.random.normal(ks[0], (embedding_size, hidden_size), jnp.float32),
        "b_obs": scale * jax.random.normal(ks[1], (1, hidden_size), jnp.float32),
        "w_act": scale * jax.random.normal(ks[2], (embedding_size, hidden_size), jnp.float32),
        "b_act": scale * jax.random.normal(ks[3], (1, hidden_size), jnp.float32),
        "w_hid": scale * jax.random.normal(ks[4], (hidden_size, H2), jnp.float32),
        "b_hid": scale * jax.random.normal(ks[5], (1, H2), jnp.float32),
        "w_sc": scale * jax.random.normal(ks[6], (H2, 1), jnp.float32),
        "b_sc": scale * jax.random.normal(ks[7], (1, 1), jnp.float32),
        # LayerNorm affine params (PyTorch default init: gamma=1, beta=0).
        "g_s": jnp.ones((1, hidden_size), jnp.float32),
        "bt_s": jnp.zeros((1, hidden_size), jnp.float32),
        "g_a": jnp.ones((1, hidden_size), jnp.float32),
        "bt_a": jnp.zeros((1, hidden_size), jnp.float32),
        "g_h": jnp.ones((1, H2), jnp.float32),
        "bt_h": jnp.zeros((1, H2), jnp.float32),
    }


if __name__ == "__main__":
    # Small, lane-aligned demo shapes: B=2 game states, A=6 candidate actions,
    # embedding_size E=128 (stand-in for BERT's pooled 768 = 6*128),
    # hidden_size H=256 so hidden_size//2 = 128 (keeps feature dims 128-aligned).
    B, A, E, H = 2, 6, 128, 256

    # TODO(synk): BERT tokenization + encoder (embed_observations/embed_actions)
    # is not translatable to a Pallas kernel; pooled embeddings are synthesized.
    key = jax.random.PRNGKey(0)
    k_obs, k_act = jax.random.split(key)
    obs_emb = jax.random.normal(k_obs, (B, E), jnp.float32)
    act_emb = jax.random.normal(k_act, (B, A, E), jnp.float32)

    params = make_params(jax.random.PRNGKey(42), E, H)

    q = jax.block_until_ready(qnet_forward(obs_emb, act_emb, params))
    q_ref = qnet_reference(obs_emb, act_emb, params)

    assert q.shape == (B, A)
    err = jnp.max(jnp.abs(q - q_ref))
    assert jnp.allclose(q, q_ref, atol=1e-3, rtol=1e-3), \
        f"mismatch vs reference (max abs err {err})"

    print("KERNEL_OK")
</pallas_src>

<mosaic_0001>
module attributes {stable_mosaic.version = 11 : i64} {
  func.func @obs_prepass_kernel(%arg0: i32, %arg1: memref<16x128xbf16, #tpu.memory_space<vmem>>, %arg2: memref<128x256xbf16, #tpu.memory_space<vmem>>, %arg3: memref<3x256xf32, #tpu.memory_space<vmem>>, %arg4: memref<16x256xf32, #tpu.memory_space<vmem>>) attributes {dimension_semantics = [#tpu.dimension_semantics<parallel>], iteration_bounds = array<i64: 1>, scalar_prefetch = 0 : i64, scratch_operands = 0 : i64, tpu.core_type = #tpu.core_type<tc>, window_params = [{transform_indices = @transform_0, window_bounds = array<i64: 16, 128>}, {pipeline_mode = #tpu.pipeline_mode<synchronous>, transform_indices = @transform_1, window_bounds = array<i64: 128, 256>}, {pipeline_mode = #tpu.pipeline_mode<synchronous>, transform_indices = @transform_2, window_bounds = array<i64: 3, 256>}, {transform_indices = @transform_3, window_bounds = array<i64: 16, 256>}]} {
    %c0 = arith.constant 0 : index
    %c0_0 = arith.constant 0 : index
    %0 = vector.load %arg1[%c0, %c0_0] : memref<16x128xbf16, #tpu.memory_space<vmem>>, vector<16x128xbf16>
    %c0_1 = arith.constant 0 : index
    %c0_2 = arith.constant 0 : index
    %1 = vector.load %arg2[%c0_1, %c0_2] : memref<128x256xbf16, #tpu.memory_space<vmem>>, vector<128x256xbf16>
    %cst = arith.constant dense<0.000000e+00> : vector<16x256xf32>
    %2 = tpu.matmul %0, %1, %cst {dimension_numbers = #tpu.dot_dimension_numbers<[1], [0], [0], [1], [0, 0, 1, 1], [], []>} : vector<16x128xbf16>, vector<128x256xbf16>, vector<16x256xf32> -> vector<16x256xf32>
    %c0_3 = arith.constant 0 : index
    %c0_4 = arith.constant 0 : index
    %3 = vector.load %arg3[%c0_3, %c0_4] : memref<3x256xf32, #tpu.memory_space<vmem>>, vector<1x256xf32>
    %4 = vector.broadcast %3 : vector<1x256xf32> to vector<16x256xf32>
    %5 = arith.addf %2, %4 : vector<16x256xf32>
    %cst_5 = arith.constant 0.000000e+00 : f32
    %6 = vector.broadcast %cst_5 : f32 to vector<16x256xf32>
    %7 = arith.cmpf oge, %5, %6 : vector<16x256xf32>
    %cst_6 = arith.constant 2.000000e-01 : f32
    %8 = vector.broadcast %cst_6 : f32 to vector<16x256xf32>
    %9 = arith.mulf %8, %5 : vector<16x256xf32>
    %10 = arith.select %7, %5, %9 : vector<16x256xi1>, vector<16x256xf32>
    %c1 = arith.constant 1 : index
    %c0_7 = arith.constant 0 : index
    %11 = vector.load %arg3[%c1, %c0_7] : memref<3x256xf32, #tpu.memory_space<vmem>>, vector<1x256xf32>
    %c2 = arith.constant 2 : index
    %c0_8 = arith.constant 0 : index
    %12 = vector.load %arg3[%c2, %c0_8] : memref<3x256xf32, #tpu.memory_space<vmem>>, vector<1x256xf32>
    %cst_9 = arith.constant dense<0.000000e+00> : vector<16xf32>
    %13 = vector.multi_reduction <add>, %10, %cst_9 [1] : vector<16x256xf32> to vector<16xf32>
    %14 = vector.shape_cast %13 : vector<16xf32> to vector<16x1xf32>
    %cst_10 = arith.constant 2.560000e+02 : f32
    %15 = vector.broadcast %cst_10 : f32 to vector<16x1xf32>
    %16 = arith.divf %14, %15 : vector<16x1xf32>
    %17 = vector.broadcast %16 : vector<16x1xf32> to vector<16x256xf32>
    %18 = arith.subf %10, %17 : vector<16x256xf32>
    %19 = arith.mulf %18, %18 : vector<16x256xf32>
    %cst_11 = arith.constant dense<0.000000e+00> : vector<16xf32>
    %20 = vector.multi_reduction <add>, %19, %cst_11 [1] : vector<16x256xf32> to vector<16xf32>
    %21 = vector.shape_cast %20 : vector<16xf32> to vector<16x1xf32>
    %cst_12 = arith.constant 2.560000e+02 : f32
    %22 = vector.broadcast %cst_12 : f32 to vector<16x1xf32>
    %23 = arith.divf %21, %22 : vector<16x1xf32>
    %cst_13 = arith.constant 9.99999974E-6 : f32
    %24 = vector.broadcast %cst_13 : f32 to vector<16x1xf32>
    %25 = arith.addf %23, %24 : vector<16x1xf32>
    %26 = math.rsqrt %25 : vector<16x1xf32>
    %27 = vector.broadcast %26 : vector<16x1xf32> to vector<16x256xf32>
    %28 = arith.mulf %18, %27 : vector<16x256xf32>
    %29 = vector.broadcast %11 : vector<1x256xf32> to vector<16x256xf32>
    %30 = arith.mulf %28, %29 : vector<16x256xf32>
    %31 = vector.broadcast %12 : vector<1x256xf32> to vector<16x256xf32>
    %32 = arith.addf %30, %31 : vector<16x256xf32>
    %c0_14 = arith.constant 0 : index
    %c0_15 = arith.constant 0 : index
    %33 = vector.load %arg4[%c0_14, %c0_15] : memref<16x256xf32, #tpu.memory_space<vmem>>, vector<16x256xf32>
    tpu.vector_store %arg4[%c0_14, %c0_15], %32 {strides = array<i32>} : memref<16x256xf32, #tpu.memory_space<vmem>>, vector<16x256xf32>,
    return
  }
  func.func @transform_0(%arg0: i32) -> (i32, i32) {
    %c0_i32 = arith.constant 0 : i32
    %c0_i32_0 = arith.constant 0 : i32
    return %arg0, %c0_i32 : i32, i32
  }
  func.func @transform_1(%arg0: i32) -> (i32, i32) {
    %c0_i32 = arith.constant 0 : i32
    %c0_i32_0 = arith.constant 0 : i32
    %c0_i32_1 = arith.constant 0 : i32
    return %c0_i32, %c0_i32_0 : i32, i32
  }
  func.func @transform_2(%arg0: i32) -> (i32, i32) {
    %c0_i32 = arith.constant 0 : i32
    %c0_i32_0 = arith.constant 0 : i32
    %c0_i32_1 = arith.constant 0 : i32
    return %c0_i32, %c0_i32_0 : i32, i32
  }
  func.func @transform_3(%arg0: i32) -> (i32, i32) {
    %c0_i32 = arith.constant 0 : i32
    %c0_i32_0 = arith.constant 0 : i32
    return %arg0, %c0_i32 : i32, i32
  }
}

</mosaic_0001>

<llo_original>
// kernel: tpu_custom_call.1
$region0: #{tpu_custom_call.1}
  #allocation0 [shape = 'u32[]', space=smem, size = 0x4, offset = 0x4, fixed_abs, tag = 'smem constant byte address 0x4 - core index']
  #allocation1 [shape = 'u32[144,128]{1,0:T(1,128)}', space=vmem, size = 0x12000, scoped, tag = 'internal scratch']
  %s0 = inlined_call_operand.hbm [shape: bf16[16,128], index: 0, kind: input, shape index: {}]
  %s1 = inlined_call_operand.hbm [shape: bf16[128,256], index: 1, kind: input, shape index: {}]
  %s2 = inlined_call_operand.hbm [shape: f32[3,256], index: 2, kind: input, shape index: {}]
  %s3 = inlined_call_operand.hbm [shape: f32[16,256], index: 3, kind: output, shape index: {}]
  %s4 = sld [smem:[#allocation0]]
  $region34: #{tpu_custom_call.1} parent=0
    _
  %s6 = ssub.s32 1, %s4
  %s7 = scalar_select 0, %s6, %s4
  $region1: #{tpu_custom_call.1} parent=0
    #allocation2 [shape = 'u8[4096]{0}', space=vmem, size = 0x1000, scoped, tag = 'input window, operand 0, single buffered']
    #allocation3 [shape = 's32[1]{0}', space=sflag, size = 0x4, scoped, tag = 'scoped memory for tpu_custom_call.1']
    #allocation4 [shape = 's32[1]{0}', space=sflag, size = 0x4, scoped, tag = 'scoped memory for tpu_custom_call.1']
    #allocation5 [shape = 'u8[65536]{0}', space=vmem, size = 0x10000, scoped, tag = 'input window, operand 1, single buffered']
    #allocation6 [shape = 's32[1]{0}', space=sflag, size = 0x4, scoped, tag = 'scoped memory for tpu_custom_call.1']
    #allocation7 [shape = 'u8[4096]{0}', space=vmem, size = 0x1000, scoped, tag = 'input window, operand 2, single buffered']
    #allocation8 [shape = 'u8[16384]{0}', space=vmem, size = 0x4000, scoped, tag = 'output window, operand 0, single buffered']
    %8 = vsyncpa [#allocation3], 0
    %9 = vsyncpa [#allocation6], 0
    %10 = vsyncpa [#allocation4], 0
    // Predicated region
    $region2: #{tpu_custom_call.1} parent=1 // pred_check
      _
    $region3: #{tpu_custom_call.1} parent=1 // pred_check_branch
      %12 = sbr.rel (0) target = $region5
    $region4: #{tpu_custom_call.1} parent=1 // pred_region
      %s14 = ssub.s32 128, 128
      %15 = vsyncadd [#allocation3], %s14
      %s16 = sshll.u32 [#allocation2], 4
      %s17 = int_to_ptr.vmem [resolvable:$true] %s16
      %22 = dma.hbm_to_vmem [thread:$0]  %s0, 128, %s17, [#allocation3], 64, 64, 4
    $region5: #{tpu_custom_call.1} parent=1 // pred_fallthru
      _
    // Predicated region
    $region6: #{tpu_custom_call.1} parent=1 // pred_check
      _
    $region7: #{tpu_custom_call.1} parent=1 // pred_check_branch
      %24 = sbr.rel (0) target = $region9
    $region8: #{tpu_custom_call.1} parent=1 // pred_region
      %s26 = ssub.s32 2048, 2048
      %27 = vsyncadd [#allocation6], %s26
      %s28 = sshll.u32 [#allocation5], 4
      %s29 = int_to_ptr.vmem [resolvable:$true] %s28
      %34 = dma.hbm_to_vmem [thread:$0]  %s1, 2048, %s29, [#allocation6], 128, 128, 8
    $region9: #{tpu_custom_call.1} parent=1 // pred_fallthru
      _
    // Predicated region
    $region10: #{tpu_custom_call.1} parent=1 // pred_check
      _
    $region11: #{tpu_custom_call.1} parent=1 // pred_check_branch
      %36 = sbr.rel (0) target = $region13
    $region12: #{tpu_custom_call.1} parent=1 // pred_region
      %s38 = ssub.s32 128, 128
      %39 = vsyncadd [#allocation6], %s38
      %s41 = sshll.u32 [#allocation7], 4
      %s42 = int_to_ptr.vmem [resolvable:$true] %s41
      %44 = dma.hbm_to_vmem [thread:$0]  %s2, 128, %s42, [#allocation6]
    $region13: #{tpu_custom_call.1} parent=1 // pred_fallthru
      _
    // Predicated region
    $region14: #{tpu_custom_call.1} parent=1 // pred_check
      _
    $region15: #{tpu_custom_call.1} parent=1 // pred_check_branch
      %46 = sbr.rel (0) target = $region17
    $region16: #{tpu_custom_call.1} parent=1 // pred_region
      %47 = dma.done [#allocation3], 128
    $region17: #{tpu_custom_call.1} parent=1 // pred_fallthru
      _
    // Predicated region
    $region18: #{tpu_custom_call.1} parent=1 // pred_check
      _
    $region19: #{tpu_custom_call.1} parent=1 // pred_check_branch
      %49 = sbr.rel (0) target = $region21
    $region20: #{tpu_custom_call.1} parent=1 // pred_region
      %50 = dma.done [#allocation6], 2048
    $region21: #{tpu_custom_call.1} parent=1 // pred_fallthru
      _
    // Predicated region
    $region22: #{tpu_custom_call.1} parent=1 // pred_check
      _
    $region23: #{tpu_custom_call.1} parent=1 // pred_check_branch
      %52 = sbr.rel (0) target = $region25
    $region24: #{tpu_custom_call.1} parent=1 // pred_region
      %53 = dma.done [#allocation6], 128
    $region25: #{tpu_custom_call.1} parent=1 // pred_fallthru
      _
    %v55 = vld [vmem:[#allocation2] sm:$0xf]
    %v56 = vld [vmem:[#allocation2 + $0x4] sm:$0xf]
    %v57 = vld [vmem:[#allocation5] sm:$0xff]
    %v58 = vld [vmem:[#allocation5 + $0x8] sm:$0xff]
    %v59 = vld [vmem:[#allocation5 + $0x10] sm:$0xff]
    %v60 = vld [vmem:[#allocation5 + $0x18] sm:$0xff]
    %v61 = vld [vmem:[#allocation5 + $0x20] sm:$0xff]
    %v62 = vld [vmem:[#allocation5 + $0x28] sm:$0xff]
    %v63 = vld [vmem:[#allocation5 + $0x30] sm:$0xff]
    %v64 = vld [vmem:[#allocation5 + $0x38] sm:$0xff]
    %v65 = vld [vmem:[#allocation5 + $0x40] sm:$0xff]
    %v66 = vld [vmem:[#allocation5 + $0x48] sm:$0xff]
    %v67 = vld [vmem:[#allocation5 + $0x50] sm:$0xff]
    %v68 = vld [vmem:[#allocation5 + $0x58] sm:$0xff]
    %v69 = vld [vmem:[#allocation5 + $0x60] sm:$0xff]
    %v70 = vld [vmem:[#allocation5 + $0x68] sm:$0xff]
    %v71 = vld [vmem:[#allocation5 + $0x70] sm:$0xff]
    %v72 = vld [vmem:[#allocation5 + $0x78] sm:$0xff]
    %v73 = vld [vmem:[#allocation7] ss:$4 sm:$0x3]
    %v75 = vlaneseq
    %v76 = vshrl.u32 %v75, 7
    %v77 = vsub.s32 0, %v76
    %v78 = vrot.slane %v73, %v77
    %v79 = vlaneseq
    %v80 = vshrl.u32 %v79, 7
    %v81 = vsub.s32 1, %v80
    %v82 = vrot.slane %v73, %v81
    %v87 = vunpack.c.l.b16 %v55
    %v88 = vunpack.c.l.b16 %v56
    %v89 = vpack.c.b16 %v88, %v87
    %v107 = vunpack.c.l.b16 %v57
    %v108 = vunpack.c.h.b16 %v57
    %v109 = vunpack.c.l.b16 %v58
    %v110 = vunpack.c.h.b16 %v58
    %v111 = vunpack.c.l.b16 %v59
    %v112 = vunpack.c.h.b16 %v59
    %v113 = vunpack.c.l.b16 %v60
    %v114 = vunpack.c.h.b16 %v60
    %v115 = vunpack.c.l.b16 %v61
    %v116 = vunpack.c.h.b16 %v61
    %v117 = vunpack.c.l.b16 %v62
    %v118 = vunpack.c.h.b16 %v62
    %v119 = vunpack.c.l.b16 %v63
    %v120 = vunpack.c.h.b16 %v63
    %v121 = vunpack.c.l.b16 %v64
    %v122 = vunpack.c.h.b16 %v64
    %v123 = vunpack.c.l.b16 %v65
    %v124 = vunpack.c.h.b16 %v65
    %v125 = vunpack.c.l.b16 %v66
    %v126 = vunpack.c.h.b16 %v66
    %v127 = vunpack.c.l.b16 %v67
    %v128 = vunpack.c.h.b16 %v67
    %v129 = vunpack.c.l.b16 %v68
    %v130 = vunpack.c.h.b16 %v68
    %v131 = vunpack.c.l.b16 %v69
    %v132 = vunpack.c.h.b16 %v69
    %v133 = vunpack.c.l.b16 %v70
    %v134 = vunpack.c.h.b16 %v70
    %v135 = vunpack.c.l.b16 %v71
    %v136 = vunpack.c.h.b16 %v71
    %v137 = vunpack.c.l.b16 %v72
    %v138 = vunpack.c.h.b16 %v72
    %v139 = vpack.c.b16 %v109, %v107
    %v140 = vpack.c.b16 %v110, %v108
    %v141 = vpack.c.b16 %v113, %v111
    %v142 = vpack.c.b16 %v114, %v112
    %v143 = vpack.c.b16 %v117, %v115
    %v144 = vpack.c.b16 %v118, %v116
    %v145 = vpack.c.b16 %v121, %v119
    %v146 = vpack.c.b16 %v122, %v120
    %v147 = vpack.c.b16 %v125, %v123
    %v148 = vpack.c.b16 %v126, %v124
    %v149 = vpack.c.b16 %v129, %v127
    %v150 = vpack.c.b16 %v130, %v128
    %v151 = vpack.c.b16 %v133, %v131
    %v152 = vpack.c.b16 %v134, %v132
    %v153 = vpack.c.b16 %v137, %v135
    %v154 = vpack.c.b16 %v138, %v136
    %171 = vmatprep.subr.bf16.mxu0 %v140
    %172 = vmatpush1.bf16.msra.mxu0 %v139
    %173 = vmatprep.subr.bf16.mxu0 %v142
    %174 = vmatpush1.bf16.msra.mxu0 %v141
    %175 = vmatprep.subr.bf16.mxu0 %v144
    %176 = vmatpush1.bf16.msra.mxu0 %v143
    %177 = vmatprep.subr.bf16.mxu0 %v146
    %178 = vmatpush1.bf16.msra.mxu0 %v145
    %179 = vmatprep.subr.bf16.mxu0 %v148
    %180 = vmatpush1.bf16.msra.mxu0 %v147
    %181 = vmatprep.subr.bf16.mxu0 %v150
    %182 = vmatpush1.bf16.msra.mxu0 %v149
    %183 = vmatprep.subr.bf16.mxu0 %v152
    %184 = vmatpush1.bf16.msra.mxu0 %v151
    %185 = vmatprep.subr.bf16.mxu0 %v154
    %186 = vmatpush1.bf16.msra.mxu0 %v153
    %187 = vmatprep.subr.bf16.mxu0 0
    %188 = vmatpush1.bf16.msra.mxu0 0
    %189 = vmatprep.subr.bf16.mxu0 0
    %190 = vmatpush1.bf16.msra.mxu0 0
    %191 = vmatprep.subr.bf16.mxu0 0
    %192 = vmatpush1.bf16.msra.mxu0 0
    %193 = vmatprep.subr.bf16.mxu0 0
    %194 = vmatpush1.bf16.msra.mxu0 0
    %195 = vmatprep.subr.bf16.mxu0 0
    %196 = vmatpush1.bf16.msra.mxu0 0
    %197 = vmatprep.subr.bf16.mxu0 0
    %198 = vmatpush1.bf16.msra.mxu0 0
    %199 = vmatprep.subr.bf16.mxu0 0
    %200 = vmatpush1.bf16.msra.mxu0 0
    %201 = vmatprep.subr.bf16.mxu0 0
    %202 = vmatpush1.bf16.msra.mxu0 0
    %203 = vmatprep.mubr.bf16.mxu0 0
    %204 = vmatmul.mubr.bf16.gmra.mrb[0].mxu0 %v89
    %v205 = vpop.f32.mrb[0].mxu0
    %v206 = vadd.f32 %v78, %v205
    %v207 = vpop.f32.mrb[0].mxu0
    %v208 = vadd.f32 %v82, %v207
    %v209 = vpop.f32.mrb[0].mxu0
    %v210 = vadd.f32 %v78, %v209
    %v211 = vpop.f32.mrb[0].mxu0
    %v212 = vadd.f32 %v82, %v211
    %213 = vdwg.mxu0
    %vm214 = vcmp.ge.f32.partialorder %v206, 0.0
    %vm215 = vcmp.ge.f32.partialorder %v208, 0.0
    %vm216 = vcmp.ge.f32.partialorder %v210, 0.0
    %vm217 = vcmp.ge.f32.partialorder %v212, 0.0
    %v218 = vmul.f32 %v206, 0.2
    %v219 = vmul.f32 %v208, 0.2
    %v220 = vmul.f32 %v210, 0.2
    %v221 = vmul.f32 %v212, 0.2
    %v222 = vsel %vm214, %v206, %v218
    %v223 = vsel %vm215, %v208, %v219
    %v224 = vsel %vm216, %v210, %v220
    %v225 = vsel %vm217, %v212, %v221
    %s226 = scalar_lea.vmem [#allocation7], 1
    %v227 = vld [vmem:[%s226] ss:$4 sm:$0x3]
    %s228 = scalar_lea.vmem [#allocation7], 2
    %v229 = vld [vmem:[%s228] ss:$4 sm:$0x3]
    %v230 = vadd.f32 %v222, %v223
    %231 = vadd.xlane.f32.xlu0 %v230
    %v232 = vpop.xlane.xlu0 %231
    %v233 = vadd.f32 %v224, %v225
    %234 = vadd.xlane.f32.xlu0 %v233
    %v235 = vpop.xlane.xlu0 %234
    %v236 = vrcp.pop 256.0
    %v237 = vmul.f32 %v232, %v236
    %v238 = vmul.f32 %v235, %v236
    %v239 = vsub.f32 %v222, %v237
    %v240 = vsub.f32 %v223, %v237
    %v241 = vsub.f32 %v224, %v238
    %v242 = vsub.f32 %v225, %v238
    %v243 = vmul.f32 %v239, %v239
    %v244 = vmul.f32 %v240, %v240
    %v245 = vmul.f32 %v241, %v241
    %v246 = vmul.f32 %v242, %v242
    %v247 = vadd.f32 %v243, %v244
    %248 = vadd.xlane.f32.xlu0 %v247
    %v249 = vpop.xlane.xlu0 %248
    %v250 = vadd.f32 %v245, %v246
    %251 = vadd.xlane.f32.xlu0 %v250
    %v252 = vpop.xlane.xlu0 %251
    %v253 = vmul.f32 %v249, %v236
    %v254 = vmul.f32 %v252, %v236
    %v255 = vadd.f32 %v253, 1e-05
    %v256 = vadd.f32 %v254, 1e-05
    %v257 = vrsqrt.pop %v255
    %v258 = vrsqrt.pop %v256
    %v259 = vmul.f32 %v239, %v257
    %v260 = vmul.f32 %v240, %v257
    %v261 = vmul.f32 %v241, %v258
    %v262 = vmul.f32 %v242, %v258
    %v264 = vlaneseq
    %v265 = vshrl.u32 %v264, 7
    %v266 = vsub.s32 0, %v265
    %v267 = vrot.slane %v227, %v266
    %v268 = vlaneseq
    %v269 = vshrl.u32 %v268, 7
    %v270 = vsub.s32 1, %v269
    %v271 = vrot.slane %v227, %v270
    %v274 = vmul.f32 %v259, %v267
    %v275 = vmul.f32 %v260, %v271
    %v276 = vmul.f32 %v261, %v267
    %v277 = vmul.f32 %v262, %v271
    %v279 = vlaneseq
    %v280 = vshrl.u32 %v279, 7
    %v281 = vsub.s32 0, %v280
    %v282 = vrot.slane %v229, %v281
    %v283 = vlaneseq
    %v284 = vshrl.u32 %v283, 7
    %v285 = vsub.s32 1, %v284
    %v286 = vrot.slane %v229, %v285
    %v289 = vadd.f32 %v274, %v282
    %v290 = vadd.f32 %v275, %v286
    %v291 = vadd.f32 %v276, %v282
    %v292 = vadd.f32 %v277, %v286
    %293 = vst [vmem:[#allocation8] sm:$0xff] %v289
    %294 = vst [vmem:[#allocation8 + $0x8] sm:$0xff] %v290
    %295 = vst [vmem:[#allocation8 + $0x10] sm:$0xff] %v291
    %296 = vst [vmem:[#allocation8 + $0x18] sm:$0xff] %v292
    // Predicated region
    $region26: #{tpu_custom_call.1} parent=1 // pred_check
      _
    $region27: #{tpu_custom_call.1} parent=1 // pred_check_branch
      %298 = sbr.rel (0) target = $region29
    $region28: #{tpu_custom_call.1} parent=1 // pred_region
      %s300 = ssub.s32 512, 512
      %301 = vsyncadd [#allocation4], %s300
      %s302 = sshll.u32 [#allocation8], 4
      %s303 = int_to_ptr.vmem [resolvable:$true] %s302
      %308 = dma.vmem_to_hbm [thread:$0]  %s303, 512, %s3, [#allocation4], 256, 256, 16
    $region29: #{tpu_custom_call.1} parent=1 // pred_fallthru
      _
    // Predicated region
    $region30: #{tpu_custom_call.1} parent=1 // pred_check
      _
    $region31: #{tpu_custom_call.1} parent=1 // pred_check_branch
      %310 = sbr.rel (0) target = $region33
    $region32: #{tpu_custom_call.1} parent=1 // pred_region
      %311 = dma.done [#allocation4], 512
    $region33: #{tpu_custom_call.1} parent=1 // pred_fallthru
      _
    %312 = vsyncpa [#allocation3], 1
    %313 = vsyncpa [#allocation6], 1
    %314 = vsyncpa [#allocation4], 1

</llo_original>
